<compile_context>
chip_gen: v5e
topology: v5e:2x2
jax: 0.10.0
libtpu: 0.0.40
codegen_flags: <defaults>
</compile_context>

<pallas_src>
import numpy as np
import jax
import jax.numpy as jnp
from jax.experimental import pallas as pl
from jax.experimental.pallas import tpu as pltpu

NEG_INF = -1e30  # stand-in for float('-inf'); underflows to exactly 0 after softmax


# ----------------------------- Pallas kernel ---------------------------------
def _make_kernel(scale, T, L, mxu_dtype):
    scale = float(scale)

    def kernel(qcat_ref, k_ref, vT_ref, mask_ref, wT_ref, b_ref, o_ref):
        # qcat : (T, 2L, E)  mxu_dtype   (queries || tf_queries along the concat axis)
        # k    : (T, L, E)   mxu_dtype
        # vT   : (T, E, L)   mxu_dtype   (values pre-transposed -> lane-dense output)
        # mask : (T, 1, 2L)  fp32 additive (-inf for unselected query columns)
        # wT   : (2L, L)     mxu_dtype   (transform weight, transposed, un-split)
        # b    : (1, L)      fp32

        # Fold the attention scale into k once (T*L*E muls instead of T*L*2L).
        k = k_ref[...] * scale

        # One merged score matmul over both branches: (T, L, 2L), fp32 accumulate.
        s = jnp.einsum('tke,tce->tkc', k, qcat_ref[...],
                       preferred_element_type=jnp.float32) + mask_ref[...]

        # Softmax over the concatenated 2L query axis (normalization deferred).
        # Flatten head-batch into rows (L % 8 == 0 -> layout-preserving reshape).
        s2 = s.reshape(T * L, 2 * L)
        row_max = jnp.max(s2, axis=-1, keepdims=True)
        p2 = jnp.exp(s2 - row_max)                                   # unnormalized probs
        inv = pl.reciprocal(jnp.sum(p2, axis=-1, keepdims=True), approx=True)  # EUP slot

        # transform Linear(2L -> L): one deep (T*L, 2L) x (2L, L) MXU matmul,
        # then deferred softmax normalization (per-row scale) and bias.
        fin = jnp.dot(p2.astype(mxu_dtype), wT_ref[...],
                      preferred_element_type=jnp.float32)            # (T*L, L)
        fin = fin * inv + b_ref[...]
        # TODO(synk): dropout(p=0.1) is identity here (eval/inference semantics).

        attnw = fin.reshape(T, L, L).astype(mxu_dtype)

        # Lane-dense output: (T, E, L) with L on lanes (unmasked vst when E < 128).
        out = jnp.einsum('tel,tml->tem', vT_ref[...], attnw,
                         preferred_element_type=jnp.float32)         # (T, E, L)
        o_ref[...] = out.astype(o_ref.dtype)

    return kernel


# --------------------------- VMEM / tiling policy -----------------------------
def _round_up(x, m):
    return ((x + m - 1) // m) * m


def _padded_bytes(shape, dtype):
    """VMEM footprint of a tile: last dim pads to 128 lanes, second-to-last pads
    to the dtype's sublane packing (8 for 4-byte, 16 for 2-byte, 32 for 1-byte)."""
    itemsize = int(jnp.dtype(dtype).itemsize)
    sublane = max(8, 32 // itemsize)
    dims = list(shape)
    dims[-1] = _round_up(dims[-1], 128)
    if len(dims) >= 2:
        dims[-2] = _round_up(dims[-2], sublane)
    n = itemsize
    for d in dims:
        n *= d
    return n


def _vmem_policy():
    """(vmem_limit_bytes, working-set budget) sized per TPU generation."""
    cap = None
    try:
        info = pltpu.get_tpu_info()
        cap = int(getattr(info, "vmem_capacity_bytes", 0)) or None
    except Exception:
        cap = None
    if cap is not None and cap >= 100 * 1024 * 1024:
        # v5e / v6e: 128 MiB physical VMEM -> use much more of it.
        return 64 * 1024 * 1024, 44 * 1024 * 1024
    # v7x (64 MiB per TensorCore) or unknown chip: stay conservative.
    return 40 * 1024 * 1024, 24 * 1024 * 1024


def _pick_heads_per_step(BH, L, E, mxu_dtype, vmem_budget_bytes, max_rows=4096):
    """Largest divisor T of BH whose per-step working set (lane-padding aware,
    including live temporaries) fits the budget, preferring grids with >= 4 and
    even steps so the software pipeline runs and v7x's two TensorCores both get
    work; never collapses to a single grid step unless BH forces it."""
    f32 = jnp.float32

    def working_set(t):
        dbuf = 2 * (_padded_bytes((t, 2 * L, E), mxu_dtype)       # qcat
                    + _padded_bytes((t, L, E), mxu_dtype)         # k
                    + _padded_bytes((t, E, L), mxu_dtype)         # vT
                    + _padded_bytes((t, 1, 2 * L), f32)           # mask
                    + _padded_bytes((t, E, L), f32))              # output
        resident = 2 * (_padded_bytes((2 * L, L), mxu_dtype)      # weight (double-buffered)
                        + _padded_bytes((1, L), f32))             # bias
        live = (2 * _padded_bytes((t * L, 2 * L), f32)            # scores, exp(scores)
                + _padded_bytes((t * L, 2 * L), mxu_dtype)        # cast copy fed to MXU
                + 2 * _padded_bytes((t * L, L), f32)              # transform out (+ normalized)
                + _padded_bytes((t, E, L), f32)                   # attn @ v result
                + 2 * _padded_bytes((t * L, 1), f32))             # row max / reciprocal
        return dbuf + resident + live

    candidates = [t for t in range(1, BH + 1)
                  if BH % t == 0 and t * L <= max_rows
                  and working_set(t) <= vmem_budget_bytes]
    if not candidates:
        candidates = [1]
    for ok in (lambda t: BH // t >= 4 and (BH // t) % 2 == 0,
               lambda t: BH // t >= 4,
               lambda t: BH // t >= 2,
               lambda t: True):
        sel = [t for t in candidates if ok(t)]
        if sel:
            return max(sel)
    return 1


# ------------------------------ pallas_call wrapper ---------------------------
def _pallas_attend(qcat, k, vT, mask_cat, wT, bias, scale, heads_per_step=None):
    BH, L2, E = qcat.shape
    L = L2 // 2
    vmem_limit, vmem_budget = _vmem_policy()
    if heads_per_step is None:
        heads_per_step = _pick_heads_per_step(BH, L, E, qcat.dtype, vmem_budget)
    T = heads_per_step
    assert BH % T == 0, (BH, T)

    kernel = _make_kernel(scale, T, L, qcat.dtype)

    qcat_spec = pl.BlockSpec((T, 2 * L, E), lambda i: (i, 0, 0))
    k_spec = pl.BlockSpec((T, L, E), lambda i: (i, 0, 0))
    v_spec = pl.BlockSpec((T, E, L), lambda i: (i, 0, 0))
    mask_spec = pl.BlockSpec((T, 1, 2 * L), lambda i: (i, 0, 0))
    # TODO(synk): weight/bias have constant index_maps; pl.Buffered(1) would save
    # one buffer each, left at default buffering for portability.
    w_spec = pl.BlockSpec((2 * L, L), lambda i: (0, 0))
    b_spec = pl.BlockSpec((1, L), lambda i: (0, 0))
    out_spec = pl.BlockSpec((T, E, L), lambda i: (i, 0, 0))

    return pl.pallas_call(
        kernel,
        out_shape=jax.ShapeDtypeStruct((BH, E, L), jnp.float32),
        grid=(BH // T,),
        in_specs=[qcat_spec, k_spec, v_spec, mask_spec, w_spec, b_spec],
        out_specs=out_spec,
        compiler_params=pltpu.CompilerParams(
            dimension_semantics=("parallel",),
            vmem_limit_bytes=vmem_limit,
        ),
    )(qcat, k, vT, mask_cat, wT, bias)


# --------------------------- Module-level wrapper -----------------------------
def mix_cross_attention_forward(tf_queries, queries, keys, values, params,
                                *, factor=5, out_channels=None,
                                mxu_dtype=jnp.bfloat16, heads_per_step=None):
    """JAX/Pallas equivalent of MixCrossAttention.forward (mask arg unused, as in torch).

    mxu_dtype: dtype of the MXU matmul operands (default bf16 — native on all
    generations' MXUs and halves q/k/v HBM+VMEM traffic).  All elementwise math
    (scale, mask add, max, exp, normalization, bias) stays fp32.  Pass
    jnp.float32 for strict numerical parity.
    """
    B, L_Q, H, E = queries.shape
    _, S, _, D = keys.shape

    # key/value length adjustment (same as torch forward)
    if L_Q > S:
        zeros = jnp.zeros_like(queries[:, : L_Q - S])
        keys = jnp.concatenate([keys.astype(jnp.float32), zeros.astype(jnp.float32)], axis=1)
        values = jnp.concatenate([values.astype(jnp.float32), zeros.astype(jnp.float32)], axis=1)
    else:
        keys = keys[:, :L_Q]
        values = values[:, :L_Q]

    scale = 1.0 / np.sqrt(out_channels)
    n_top = min(int(factor * np.ceil(np.log(L_Q))), L_Q)

    q_bh = jnp.transpose(queries, (0, 2, 1, 3)).astype(jnp.float32)     # (B,H,L,E)
    tfq_bh = jnp.transpose(tf_queries, (0, 2, 1, 3)).astype(jnp.float32)
    k_bh = jnp.transpose(keys, (0, 2, 1, 3)).astype(jnp.float32)
    v_bh = jnp.transpose(values, (0, 2, 1, 3)).astype(jnp.float32)

    # --- top-k query selection glue: additive masks (fp32 selection == reference) ---
    # TODO(synk): rfft/irfft cross-correlation and top_k have no clean Pallas TPU
    # equivalent; kept in XLA glue.
    # TODO(synk): for long L the dense kernel wastes >= (1 - n_top/L) of its score /
    # exp / transform work on exact zeros; a scalar-prefetch (top-k index) sparse
    # variant would be a ~L/n_top algorithmic win.
    q_fft = jnp.fft.rfft(jnp.transpose(queries, (0, 2, 3, 1)).astype(jnp.float32), axis=-1)
    k_fft = jnp.fft.rfft(jnp.transpose(keys, (0, 2, 3, 1)).astype(jnp.float32), axis=-1)
    autocorr = jnp.transpose(jnp.fft.irfft(q_fft * jnp.conj(k_fft), axis=-1), (0, 1, 3, 2))
    amp_t = jnp.linalg.norm(autocorr, axis=-1)     # (B,H,L)   corr=1 branch
    amp_tf = jnp.linalg.norm(tfq_bh, axis=-1)      # (B,H,L)   corr=0 branch

    def topk_additive_mask(amp):
        _, idx = jax.lax.top_k(amp, n_top)                                   # (B,H,n)
        sel = jnp.sum(jax.nn.one_hot(idx, L_Q, dtype=jnp.float32), axis=2)   # (B,H,L)
        return jnp.where(sel > 0, 0.0, NEG_INF).astype(jnp.float32)

    mask_t = topk_additive_mask(amp_t)
    mask_tf = topk_additive_mask(amp_tf)
    mask_cat = jnp.concatenate([mask_t, mask_tf], axis=-1).reshape(B * H, 1, 2 * L_Q)

    # merged branch operand: queries || tf_queries along the (virtual concat) axis,
    # matching the reference's cat([attn_t, attn_tf], dim=-1) column ordering.
    qcat = jnp.concatenate([q_bh, tfq_bh], axis=2).reshape(B * H, 2 * L_Q, E).astype(mxu_dtype)
    k_f = k_bh.reshape(B * H, L_Q, E).astype(mxu_dtype)
    # values pre-transposed so the kernel's output block is (T, E, L): lane-dense.
    vT_f = jnp.transpose(v_bh, (0, 1, 3, 2)).reshape(B * H, E, L_Q).astype(mxu_dtype)

    wT = params["transform_w"].T.astype(mxu_dtype)               # (2L, L) un-split
    bias = params["transform_b"].reshape(1, L_Q).astype(jnp.float32)

    out = _pallas_attend(qcat, k_f, vT_f, mask_cat, wT, bias, scale,
                         heads_per_step=heads_per_step)          # (BH, E, L)
    out = out.reshape(B, H, E, L_Q)
    return jnp.transpose(out, (0, 3, 1, 2)), None                # (B, L_Q, H, D), None


# ------------------------------ plain-JAX reference ---------------------------
def reference_forward(tf_queries, queries, keys, values, params, *, factor, out_channels):
    B, L_Q, H, E = queries.shape
    _, S, _, D = keys.shape
    if L_Q > S:
        zeros = jnp.zeros_like(queries[:, : L_Q - S])
        keys = jnp.concatenate([keys, zeros], axis=1)
        values = jnp.concatenate([values, zeros], axis=1)
    else:
        keys = keys[:, :L_Q]
        values = values[:, :L_Q]
    scale = 1.0 / np.sqrt(out_channels)
    n_top = min(int(factor * np.ceil(np.log(L_Q))), L_Q)
    hp = jax.lax.Precision.HIGHEST

    def get_sig_scores(n, q_in, k_in, corr):
        q = jnp.transpose(q_in, (0, 2, 1, 3))
        k = jnp.transpose(k_in, (0, 2, 1, 3))
        if corr:
            qf = jnp.fft.rfft(jnp.transpose(q_in, (0, 2, 3, 1)), axis=-1)
            kf = jnp.fft.rfft(jnp.transpose(k_in, (0, 2, 3, 1)), axis=-1)
            autoc = jnp.transpose(jnp.fft.irfft(qf * jnp.conj(kf), axis=-1), (0, 1, 3, 2))
        else:
            autoc = q
        amp = jnp.linalg.norm(autoc, axis=-1)
        _, idx = jax.lax.top_k(amp, n)                                        # (B,H,n)
        q_sel = jnp.take_along_axis(q, idx[..., None], axis=2)                # (B,H,n,E)
        scores = jnp.einsum('bhnd,bhmd->bhnm', q_sel, k, precision=hp) * scale
        full = jnp.full((B, H, L_Q, L_Q), -jnp.inf, dtype=jnp.float32)
        bi = jnp.arange(B)[:, None, None]
        hi = jnp.arange(H)[None, :, None]
        full = full.at[bi, hi, idx, :].set(scores)
        return jnp.transpose(full, (0, 1, 3, 2))

    attn_t = get_sig_scores(n_top, queries, keys, 1)
    attn_tf = get_sig_scores(n_top, tf_queries, keys, 0)
    cat = jax.nn.softmax(jnp.concatenate([attn_t, attn_tf], axis=-1), axis=-1)
    final = jnp.einsum('bhlc,oc->bhlo', cat, params["transform_w"], precision=hp) \
        + params["transform_b"]
    out = jnp.einsum('bhlm,bhmd->bhld', final,
                     jnp.transpose(values, (0, 2, 1, 3)), precision=hp)
    return jnp.transpose(out, (0, 2, 1, 3))


# ----------------------------------- main --------------------------------------
if __name__ == "__main__":
    B, L_Q, H, E = 2, 16, 2, 16    # small shapes; S == L_Q, D == E
    S, D = L_Q, E
    out_channels = E               # module arg used only for scale = 1/sqrt(out_channels)
    factor = 5

    key = jax.random.PRNGKey(0)
    k1, k2, k3, k4, k5, k6, k7 = jax.random.split(key, 7)

    tf_queries = jax.random.normal(k1, (B, L_Q, H, E), dtype=jnp.float32)
    queries = jax.random.normal(k2, (B, L_Q, H, E), dtype=jnp.float32)
    keys = jax.random.normal(k3, (B, S, H, D), dtype=jnp.float32)
    values = jax.random.normal(k4, (B, S, H, D), dtype=jnp.float32)

    # deterministic parameter init (shapes per __init__; synthetic, no checkpoint)
    lim = 1.0 / np.sqrt(2 * L_Q)
    params = {
        "transform_w": jax.random.uniform(k5, (L_Q, 2 * L_Q),
                                          minval=-lim, maxval=lim, dtype=jnp.float32),
        "transform_b": jax.random.uniform(k6, (L_Q,),
                                          minval=-lim, maxval=lim, dtype=jnp.float32),
        # nn.Parameter(torch.rand(8, seq_len_q, 2)) — unused in forward, kept for parity
        "weights": jax.random.uniform(k7, (8, L_Q, 2), dtype=jnp.float32),
    }

    ref = reference_forward(tf_queries, queries, keys, values, params,
                            factor=factor, out_channels=out_channels)
    ref = jax.block_until_ready(ref)

    # fp32 MXU operands: strict(er) numerical check.
    out_f32, attn = mix_cross_attention_forward(
        tf_queries, queries, keys, values, params,
        factor=factor, out_channels=out_channels, mxu_dtype=jnp.float32)
    out_f32 = jax.block_until_ready(out_f32)
    assert out_f32.shape == (B, L_Q, H, D), out_f32.shape
    assert attn is None
    assert bool(jnp.allclose(out_f32, ref, rtol=2e-2, atol=2e-2)), "fp32 kernel/reference mismatch"

    # default path: bf16 MXU operands, fp32 accumulation + fp32 elementwise.
    out_bf16, _ = mix_cross_attention_forward(
        tf_queries, queries, keys, values, params,
        factor=factor, out_channels=out_channels)
    out_bf16 = jax.block_until_ready(out_bf16)
    assert bool(jnp.allclose(out_bf16, ref, rtol=1e-1, atol=1e-1)), "bf16 kernel/reference mismatch"

    print("KERNEL_OK")
</pallas_src>

<mosaic_0001>
module attributes {stable_mosaic.version = 11 : i64} {
  func.func @kernel(%arg0: i32, %arg1: memref<1x32x16xf32, #tpu.memory_space<vmem>>, %arg2: memref<1x16x16xf32, #tpu.memory_space<vmem>>, %arg3: memref<1x16x16xf32, #tpu.memory_space<vmem>>, %arg4: memref<1x1x32xf32, #tpu.memory_space<vmem>>, %arg5: memref<32x16xf32, #tpu.memory_space<vmem>>, %arg6: memref<1x16xf32, #tpu.memory_space<vmem>>, %arg7: memref<1x16x16xf32, #tpu.memory_space<vmem>>) attributes {dimension_semantics = [#tpu.dimension_semantics<parallel>], iteration_bounds = array<i64: 4>, scalar_prefetch = 0 : i64, scratch_operands = 0 : i64, tpu.core_type = #tpu.core_type<tc>, window_params = [{transform_indices = @transform_0, window_bounds = array<i64: 1, 32, 16>}, {transform_indices = @transform_1, window_bounds = array<i64: 1, 16, 16>}, {transform_indices = @transform_2, window_bounds = array<i64: 1, 16, 16>}, {transform_indices = @transform_3, window_bounds = array<i64: 1, 1, 32>}, {pipeline_mode = #tpu.pipeline_mode<synchronous>, transform_indices = @transform_4, window_bounds = array<i64: 32, 16>}, {pipeline_mode = #tpu.pipeline_mode<synchronous>, transform_indices = @transform_5, window_bounds = array<i64: 1, 16>}, {transform_indices = @transform_6, window_bounds = array<i64: 1, 16, 16>}]} {
    %c0 = arith.constant 0 : index
    %c0_0 = arith.constant 0 : index
    %c0_1 = arith.constant 0 : index
    %0 = vector.load %arg2[%c0, %c0_0, %c0_1] : memref<1x16x16xf32, #tpu.memory_space<vmem>>, vector<1x16x16xf32>
    %cst = arith.constant 2.500000e-01 : f32
    %1 = vector.broadcast %cst : f32 to vector<1x16x16xf32>
    %2 = arith.mulf %0, %1 : vector<1x16x16xf32>
    %c0_2 = arith.constant 0 : index
    %c0_3 = arith.constant 0 : index
    %c0_4 = arith.constant 0 : index
    %3 = vector.load %arg1[%c0_2, %c0_3, %c0_4] : memref<1x32x16xf32, #tpu.memory_space<vmem>>, vector<1x32x16xf32>
    "tpu.trace_start"() <{level = 10 : i32, message = "tke,tce->tkc"}> : () -> ()
    %cst_5 = arith.constant dense<0.000000e+00> : vector<1x16x32xf32>
    %4 = tpu.matmul %2, %3, %cst_5 {dimension_numbers = #tpu.dot_dimension_numbers<[2], [2], [1], [1], [0, 0, 0, 1, 1, 1], [0], [0]>} : vector<1x16x16xf32>, vector<1x32x16xf32>, vector<1x16x32xf32> -> vector<1x16x32xf32>
    "tpu.trace_stop"() : () -> ()
    %c0_6 = arith.constant 0 : index
    %c0_7 = arith.constant 0 : index
    %c0_8 = arith.constant 0 : index
    %5 = vector.load %arg4[%c0_6, %c0_7, %c0_8] : memref<1x1x32xf32, #tpu.memory_space<vmem>>, vector<1x1x32xf32>
    %6 = vector.broadcast %5 : vector<1x1x32xf32> to vector<1x16x32xf32>
    %7 = arith.addf %4, %6 : vector<1x16x32xf32>
    %8 = vector.shape_cast %7 : vector<1x16x32xf32> to vector<16x32xf32>
    %cst_9 = arith.constant dense<0xFF800000> : vector<16xf32>
    %9 = vector.multi_reduction <maximumf>, %8, %cst_9 [1] : vector<16x32xf32> to vector<16xf32>
    %10 = vector.shape_cast %9 : vector<16xf32> to vector<16x1xf32>
    %11 = vector.broadcast %10 : vector<16x1xf32> to vector<16x32xf32>
    %12 = arith.subf %8, %11 : vector<16x32xf32>
    %13 = math.exp %12 : vector<16x32xf32>
    %cst_10 = arith.constant dense<0.000000e+00> : vector<16xf32>
    %14 = vector.multi_reduction <add>, %13, %cst_10 [1] : vector<16x32xf32> to vector<16xf32>
    %15 = vector.shape_cast %14 : vector<16xf32> to vector<16x1xf32>
    %16 = tpu.reciprocal %15 {approx = true} : vector<16x1xf32> -> vector<16x1xf32>
    %c0_11 = arith.constant 0 : index
    %c0_12 = arith.constant 0 : index
    %17 = vector.load %arg5[%c0_11, %c0_12] : memref<32x16xf32, #tpu.memory_space<vmem>>, vector<32x16xf32>
    %cst_13 = arith.constant dense<0.000000e+00> : vector<16x16xf32>
    %18 = tpu.matmul %13, %17, %cst_13 {dimension_numbers = #tpu.dot_dimension_numbers<[1], [0], [0], [1], [0, 0, 1, 1], [], []>} : vector<16x32xf32>, vector<32x16xf32>, vector<16x16xf32> -> vector<16x16xf32>
    %19 = vector.broadcast %16 : vector<16x1xf32> to vector<16x16xf32>
    %20 = arith.mulf %18, %19 : vector<16x16xf32>
    %c0_14 = arith.constant 0 : index
    %c0_15 = arith.constant 0 : index
    %21 = vector.load %arg6[%c0_14, %c0_15] : memref<1x16xf32, #tpu.memory_space<vmem>>, vector<1x16xf32>
    %22 = vector.broadcast %21 : vector<1x16xf32> to vector<16x16xf32>
    %23 = arith.addf %20, %22 : vector<16x16xf32>
    %24 = vector.shape_cast %23 : vector<16x16xf32> to vector<1x16x16xf32>
    %c0_16 = arith.constant 0 : index
    %c0_17 = arith.constant 0 : index
    %c0_18 = arith.constant 0 : index
    %25 = vector.load %arg3[%c0_16, %c0_17, %c0_18] : memref<1x16x16xf32, #tpu.memory_space<vmem>>, vector<1x16x16xf32>
    "tpu.trace_start"() <{level = 10 : i32, message = "tel,tml->tem"}> : () -> ()
    %cst_19 = arith.constant dense<0.000000e+00> : vector<1x16x16xf32>
    %26 = tpu.matmul %25, %24, %cst_19 {dimension_numbers = #tpu.dot_dimension_numbers<[2], [2], [1], [1], [0, 0, 0, 1, 1, 1], [0], [0]>} : vector<1x16x16xf32>, vector<1x16x16xf32>, vector<1x16x16xf32> -> vector<1x16x16xf32>
    "tpu.trace_stop"() : () -> ()
    %c0_20 = arith.constant 0 : index
    %c0_21 = arith.constant 0 : index
    %c0_22 = arith.constant 0 : index
    %27 = vector.load %arg7[%c0_20, %c0_21, %c0_22] : memref<1x16x16xf32, #tpu.memory_space<vmem>>, vector<1x16x16xf32>
    tpu.vector_store %arg7[%c0_20, %c0_21, %c0_22], %26 {strides = array<i32>} : memref<1x16x16xf32, #tpu.memory_space<vmem>>, vector<1x16x16xf32>,
    return
  }
  func.func @transform_0(%arg0: i32) -> (i32, i32, i32) {
    %c0_i32 = arith.constant 0 : i32
    %c0_i32_0 = arith.constant 0 : i32
    %c0_i32_1 = arith.constant 0 : i32
    return %arg0, %c0_i32, %c0_i32_0 : i32, i32, i32
  }
  func.func @transform_1(%arg0: i32) -> (i32, i32, i32) {
    %c0_i32 = arith.constant 0 : i32
    %c0_i32_0 = arith.constant 0 : i32
    %c0_i32_1 = arith.constant 0 : i32
    return %arg0, %c0_i32, %c0_i32_0 : i32, i32, i32
  }
  func.func @transform_2(%arg0: i32) -> (i32, i32, i32) {
    %c0_i32 = arith.constant 0 : i32
    %c0_i32_0 = arith.constant 0 : i32
    %c0_i32_1 = arith.constant 0 : i32
    return %arg0, %c0_i32, %c0_i32_0 : i32, i32, i32
  }
  func.func @transform_3(%arg0: i32) -> (i32, i32, i32) {
    %c0_i32 = arith.constant 0 : i32
    %c0_i32_0 = arith.constant 0 : i32
    %c0_i32_1 = arith.constant 0 : i32
    return %arg0, %c0_i32, %c0_i32_0 : i32, i32, i32
  }
  func.func @transform_4(%arg0: i32) -> (i32, i32) {
    %c0_i32 = arith.constant 0 : i32
    %c0_i32_0 = arith.constant 0 : i32
    %c0_i32_1 = arith.constant 0 : i32
    return %c0_i32, %c0_i32_0 : i32, i32
  }
  func.func @transform_5(%arg0: i32) -> (i32, i32) {
    %c0_i32 = arith.constant 0 : i32
    %c0_i32_0 = arith.constant 0 : i32
    %c0_i32_1 = arith.constant 0 : i32
    return %c0_i32, %c0_i32_0 : i32, i32
  }
  func.func @transform_6(%arg0: i32) -> (i32, i32, i32) {
    %c0_i32 = arith.constant 0 : i32
    %c0_i32_0 = arith.constant 0 : i32
    %c0_i32_1 = arith.constant 0 : i32
    return %arg0, %c0_i32, %c0_i32_0 : i32, i32, i32
  }
}

</mosaic_0001>

<llo_original>
// kernel: tpu_custom_call.1
$region0: #{tpu_custom_call.1}
  #allocation0 [shape = 'u32[]', space=smem, size = 0x4, offset = 0x4, fixed_abs, tag = 'smem constant byte address 0x4 - core index']
  #allocation1 [shape = 'u32[72,128]{1,0:T(1,128)}', space=vmem, size = 0x9000, scoped, tag = 'internal scratch']
  %s0 = inlined_call_operand.vmem [shape: f32[4,32,16], index: 0, kind: input, shape index: {}]
  %s1 = inlined_call_operand.vmem [shape: f32[4,16,16], index: 1, kind: input, shape index: {}]
  %s2 = inlined_call_operand.vmem [shape: f32[4,16,16], index: 2, kind: input, shape index: {}]
  %s3 = inlined_call_operand.vmem [shape: f32[4,1,32], index: 3, kind: input, shape index: {}]
  %s4 = inlined_call_operand.vmem [shape: f32[32,16], index: 4, kind: input, shape index: {}]
  %s5 = inlined_call_operand.vmem [shape: f32[1,16], index: 5, kind: input, shape index: {}]
  %s6 = inlined_call_operand.hbm [shape: f32[4,16,16], index: 6, kind: output, shape index: {}]
  %s7 = sld [smem:[#allocation0]]
  $region57: #{tpu_custom_call.1} parent=0
    _
  %s9 = ssub.s32 1, %s7
  %s10 = scalar_select 0, %s9, %s7
  $region1: #{tpu_custom_call.1} parent=0
    #allocation2 [shape = 'u8[16384]{0}', space=vmem, size = 0x4000, scoped, tag = 'output window, operand 0']
    #allocation3 [shape = 's32[2]{0}', space=sflag, size = 0x8, scoped, tag = 'scoped memory for tpu_custom_call.1']
    %11 = vsyncpa [#allocation3], 0
    %s12 = scalar_lea.sflag [#allocation3], 1
    %13 = vsyncpa %s12, 0
    loop: start=0, step=1, limit=6
    $region2: #{tpu_custom_call.1} parent=1 // loop_pre_header
      _
    $region3: #{tpu_custom_call.1} parent=1 // loop_header
      %s15 = sphi 0, %s19
      %p16 = scmp.ge.s32.totalorder %s15, 6
      %s25 = sphi 0, %s27
      %s28 = sphi 0, %s25
      %s29 = sphi 0, %s28
      %s45 = sphi 0, %s29
      %s51 = sphi 0, %s53
      %s54 = sphi 0, %s51
      %s55 = sphi 0, %s54
      %s71 = sphi 0, %s55
      %s77 = sphi 0, %s79
      %s80 = sphi 0, %s77
      %s81 = sphi 0, %s80
      %s97 = sphi 0, %s81
      %s103 = sphi 0, %s105
      %s106 = sphi 0, %s103
      %s107 = sphi 0, %s106
      %s123 = sphi 0, %s107
      %s127 = sphi 0, %s127
      %s129 = sphi 0, %s127
      %s130 = sphi 0, %s129
      %s144 = sphi 0, %s130
      %s148 = sphi 0, %s148
      %s150 = sphi 0, %s148
      %s151 = sphi 0, %s150
      %s165 = sphi 0, %s151
      %s171 = sphi 0, %s173
      %s174 = sphi 0, %s171
      %s175 = sphi 0, %s174
      %s191 = sphi 0, %s175
    $region4: #{tpu_custom_call.1} parent=1 // loop_header_branch
      %18 = sbr.rel (%p16) target = $region8
    $region5: #{tpu_custom_call.1} parent=1 // loop_body
      %s20 = ssub.s32 %s15, 1
      %s21 = ssub.s32 %s15, 2
      %s22 = sadd.s32 %s15, 1
      %s23 = ssub.s32 %s15, %s22
      %p24 = scmp.eq.s32.totalorder %s23, 0
      %s26 = sadd.s32 %s25, 1
      %s27 = scalar_select %p24, %s25, %s26
      %p30 = pneg %p24
      %p31 = scmp.eq.s32.totalorder %s15, 3
      %p32 = por %p30, %p31
      %p33 = scmp.ne.s32.totalorder %s25, %s28
      %p34 = scmp.eq.s32.totalorder %s15, 0
      %p35 = por %p33, %p34
      %p36 = scmp.ne.s32.totalorder %s25, %s28
      %p37 = scmp.eq.s32.totalorder %s20, 3
      %p38 = por %p36, %p37
      %p39 = scmp.ne.s32.totalorder %s28, %s29
      %p40 = scmp.eq.s32.totalorder %s20, 0
      %p41 = por %p39, %p40
      %p42 = scmp.ne.s32.totalorder %s28, %s29
      %p43 = scmp.eq.s32.totalorder %s21, 3
      %p44 = por %p42, %p43
      %p46 = scmp.ne.s32.totalorder %s29, %s45
      %p47 = scmp.eq.s32.totalorder %s21, 0
      %p48 = por %p46, %p47
      %s49 = ssub.s32 %s15, %s22
      %p50 = scmp.eq.s32.totalorder %s49, 0
      %s52 = sadd.s32 %s51, 1
      %s53 = scalar_select %p50, %s51, %s52
      %p56 = pneg %p50
      %p57 = scmp.eq.s32.totalorder %s15, 3
      %p58 = por %p56, %p57
      %p59 = scmp.ne.s32.totalorder %s51, %s54
      %p60 = scmp.eq.s32.totalorder %s15, 0
      %p61 = por %p59, %p60
      %p62 = scmp.ne.s32.totalorder %s51, %s54
      %p63 = scmp.eq.s32.totalorder %s20, 3
      %p64 = por %p62, %p63
      %p65 = scmp.ne.s32.totalorder %s54, %s55
      %p66 = scmp.eq.s32.totalorder %s20, 0
      %p67 = por %p65, %p66
      %p68 = scmp.ne.s32.totalorder %s54, %s55
      %p69 = scmp.eq.s32.totalorder %s21, 3
      %p70 = por %p68, %p69
      %p72 = scmp.ne.s32.totalorder %s55, %s71
      %p73 = scmp.eq.s32.totalorder %s21, 0
      %p74 = por %p72, %p73
      %s75 = ssub.s32 %s15, %s22
      %p76 = scmp.eq.s32.totalorder %s75, 0
      %s78 = sadd.s32 %s77, 1
      %s79 = scalar_select %p76, %s77, %s78
      %p82 = pneg %p76
      %p83 = scmp.eq.s32.totalorder %s15, 3
      %p84 = por %p82, %p83
      %p85 = scmp.ne.s32.totalorder %s77, %s80
      %p86 = scmp.eq.s32.totalorder %s15, 0
      %p87 = por %p85, %p86
      %p88 = scmp.ne.s32.totalorder %s77, %s80
      %p89 = scmp.eq.s32.totalorder %s20, 3
      %p90 = por %p88, %p89
      %p91 = scmp.ne.s32.totalorder %s80, %s81
      %p92 = scmp.eq.s32.totalorder %s20, 0
      %p93 = por %p91, %p92
      %p94 = scmp.ne.s32.totalorder %s80, %s81
      %p95 = scmp.eq.s32.totalorder %s21, 3
      %p96 = por %p94, %p95
      %p98 = scmp.ne.s32.totalorder %s81, %s97
      %p99 = scmp.eq.s32.totalorder %s21, 0
      %p100 = por %p98, %p99
      %s101 = ssub.s32 %s15, %s22
      %p102 = scmp.eq.s32.totalorder %s101, 0
      %s104 = sadd.s32 %s103, 1
      %s105 = scalar_select %p102, %s103, %s104
      %p108 = pneg %p102
      %p109 = scmp.eq.s32.totalorder %s15, 3
      %p110 = por %p108, %p109
      %p111 = scmp.ne.s32.totalorder %s103, %s106
      %p112 = scmp.eq.s32.totalorder %s15, 0
      %p113 = por %p111, %p112
      %p114 = scmp.ne.s32.totalorder %s103, %s106
      %p115 = scmp.eq.s32.totalorder %s20, 3
      %p116 = por %p114, %p115
      %p117 = scmp.ne.s32.totalorder %s106, %s107
      %p118 = scmp.eq.s32.totalorder %s20, 0
      %p119 = por %p117, %p118
      %p120 = scmp.ne.s32.totalorder %s106, %s107
      %p121 = scmp.eq.s32.totalorder %s21, 3
      %p122 = por %p120, %p121
      %p124 = scmp.ne.s32.totalorder %s107, %s123
      %p125 = scmp.eq.s32.totalorder %s21, 0
      %p126 = por %p124, %p125
      %s128 = sadd.s32 %s127, 1
      %p131 = scmp.eq.s32.totalorder %s15, 3
      %p132 = scmp.ne.s32.totalorder %s127, %s129
      %p133 = scmp.eq.s32.totalorder %s15, 0
      %p134 = por %p132, %p133
      %p135 = scmp.ne.s32.totalorder %s127, %s129
      %p136 = scmp.eq.s32.totalorder %s20, 3
      %p137 = por %p135, %p136
      %p138 = scmp.ne.s32.totalorder %s129, %s130
      %p139 = scmp.eq.s32.totalorder %s20, 0
      %p140 = por %p138, %p139
      %p141 = scmp.ne.s32.totalorder %s129, %s130
      %p142 = scmp.eq.s32.totalorder %s21, 3
      %p143 = por %p141, %p142
      %p145 = scmp.ne.s32.totalorder %s130, %s144
      %p146 = scmp.eq.s32.totalorder %s21, 0
      %p147 = por %p145, %p146
      %s149 = sadd.s32 %s148, 1
      %p152 = scmp.eq.s32.totalorder %s15, 3
      %p153 = scmp.ne.s32.totalorder %s148, %s150
      %p154 = scmp.eq.s32.totalorder %s15, 0
      %p155 = por %p153, %p154
      %p156 = scmp.ne.s32.totalorder %s148, %s150
      %p157 = scmp.eq.s32.totalorder %s20, 3
      %p158 = por %p156, %p157
      %p159 = scmp.ne.s32.totalorder %s150, %s151
      %p160 = scmp.eq.s32.totalorder %s20, 0
      %p161 = por %p159, %p160
      %p162 = scmp.ne.s32.totalorder %s150, %s151
      %p163 = scmp.eq.s32.totalorder %s21, 3
      %p164 = por %p162, %p163
      %p166 = scmp.ne.s32.totalorder %s151, %s165
      %p167 = scmp.eq.s32.totalorder %s21, 0
      %p168 = por %p166, %p167
      %s169 = ssub.s32 %s15, %s22
      %p170 = scmp.eq.s32.totalorder %s169, 0
      %s172 = sadd.s32 %s171, 1
      %s173 = scalar_select %p170, %s171, %s172
      %p176 = pneg %p170
      %p177 = scmp.eq.s32.totalorder %s15, 3
      %p178 = por %p176, %p177
      %p179 = scmp.ne.s32.totalorder %s171, %s174
      %p180 = scmp.eq.s32.totalorder %s15, 0
      %p181 = por %p179, %p180
      %p182 = scmp.ne.s32.totalorder %s171, %s174
      %p183 = scmp.eq.s32.totalorder %s20, 3
      %p184 = por %p182, %p183
      %p185 = scmp.ne.s32.totalorder %s174, %s175
      %p186 = scmp.eq.s32.totalorder %s20, 0
      %p187 = por %p185, %p186
      %p188 = scmp.ne.s32.totalorder %s174, %s175
      %p189 = scmp.eq.s32.totalorder %s21, 3
      %p190 = por %p188, %p189
      %p192 = scmp.ne.s32.totalorder %s175, %s191
      %p193 = scmp.eq.s32.totalorder %s21, 0
      %p194 = por %p192, %p193
      %p195 = scmp.le.s32.totalorder 1, %s15
      %p196 = scmp.lt.s32.totalorder %s15, 5
      %p197 = pnand %p195, %p196
      %p198 = pneg %p197
      // Predicated region
      $region9: #{tpu_custom_call.1} parent=5 // pred_check
        _
      $region10: #{tpu_custom_call.1} parent=5 // pred_check_branch
        %200 = sbr.rel (%p197) target = $region12
      $region11: #{tpu_custom_call.1} parent=5 // pred_region
        %s201 = ssub.s32 %s15, 1
        // Predicated region
        $region13: #{tpu_custom_call.1} parent=11 // pred_check
          %p202 = pneg %p140
        $region14: #{tpu_custom_call.1} parent=11 // pred_check_branch
          %204 = sbr.rel (%p202) target = $region16
        $region15: #{tpu_custom_call.1} parent=11 // pred_region
          _
        $region16: #{tpu_custom_call.1} parent=11 // pred_fallthru
          _
        // Predicated region
        $region17: #{tpu_custom_call.1} parent=11 // pred_check
          %p205 = pneg %p161
        $region18: #{tpu_custom_call.1} parent=11 // pred_check_branch
          %207 = sbr.rel (%p205) target = $region20
        $region19: #{tpu_custom_call.1} parent=11 // pred_region
          _
        $region20: #{tpu_custom_call.1} parent=11 // pred_fallthru
          _
      $region12: #{tpu_custom_call.1} parent=5 // pred_fallthru
        _
      %p208 = scmp.lt.s32.totalorder %s15, 4
      // Predicated region
      $region21: #{tpu_custom_call.1} parent=5 // pred_check
        %p209 = pneg %p208
      $region22: #{tpu_custom_call.1} parent=5 // pred_check_branch
        %211 = sbr.rel (%p209) target = $region24
      $region23: #{tpu_custom_call.1} parent=5 // pred_region
        // Predicated region
        $region25: #{tpu_custom_call.1} parent=23 // pred_check
          %p212 = pneg %p35
        $region26: #{tpu_custom_call.1} parent=23 // pred_check_branch
          %214 = sbr.rel (%p212) target = $region28
        $region27: #{tpu_custom_call.1} parent=23 // pred_region
          %p215 = scmp.lt.s32.totalorder %s15, 3
          %s216 = scalar_select %p215, %s15, 3
          %s217 = smul.addr %s216, 4
          %s218 = smul.addr %s217, 8
          %s219 = scalar_lea.vmem %s0, %s218
        $region28: #{tpu_custom_call.1} parent=23 // pred_fallthru
          _
        // Predicated region
        $region29: #{tpu_custom_call.1} parent=23 // pred_check
          %p220 = pneg %p61
        $region30: #{tpu_custom_call.1} parent=23 // pred_check_branch
          %222 = sbr.rel (%p220) target = $region32
        $region31: #{tpu_custom_call.1} parent=23 // pred_region
          %p223 = scmp.lt.s32.totalorder %s15, 3
          %s224 = scalar_select %p223, %s15, 3
          %s225 = smul.addr %s224, 2
          %s226 = smul.addr %s225, 8
          %s227 = scalar_lea.vmem %s1, %s226
        $region32: #{tpu_custom_call.1} parent=23 // pred_fallthru
          _
        // Predicated region
        $region33: #{tpu_custom_call.1} parent=23 // pred_check
          %p228 = pneg %p87
        $region34: #{tpu_custom_call.1} parent=23 // pred_check_branch
          %230 = sbr.rel (%p228) target = $region36
        $region35: #{tpu_custom_call.1} parent=23 // pred_region
          %p231 = scmp.lt.s32.totalorder %s15, 3
          %s232 = scalar_select %p231, %s15, 3
          %s233 = smul.addr %s232, 2
          %s234 = smul.addr %s233, 8
          %s235 = scalar_lea.vmem %s2, %s234
        $region36: #{tpu_custom_call.1} parent=23 // pred_fallthru
          _
        // Predicated region
        $region37: #{tpu_custom_call.1} parent=23 // pred_check
          %p236 = pneg %p113
        $region38: #{tpu_custom_call.1} parent=23 // pred_check_branch
          %238 = sbr.rel (%p236) target = $region40
        $region39: #{tpu_custom_call.1} parent=23 // pred_region
          %p239 = scmp.lt.s32.totalorder %s15, 3
          %s240 = scalar_select %p239, %s15, 3
          %s241 = scalar_lea.vmem %s3, %s240
        $region40: #{tpu_custom_call.1} parent=23 // pred_fallthru
          _
      $region24: #{tpu_custom_call.1} parent=5 // pred_fallthru
        _
      %p242 = scmp.le.s32.totalorder 1, %s15
      %p243 = scmp.lt.s32.totalorder %s15, 5
      %p244 = pnand %p242, %p243
      %p245 = pneg %p244
      // Predicated region
      $region41: #{tpu_custom_call.1} parent=5 // pred_check
        _
      $region42: #{tpu_custom_call.1} parent=5 // pred_check_branch
        %247 = sbr.rel (%p244) target = $region44
      $region43: #{tpu_custom_call.1} parent=5 // pred_region
        %s248 = ssub.s32 %s15, 1
        %p249 = scmp.lt.s32.totalorder %s20, 3
        %s250 = scalar_select %p249, %s20, 3
        %s251 = smul.addr %s250, 4
        %s252 = smul.addr %s251, 8
        %s253 = scalar_lea.vmem %s0, %s252
        %p254 = pneg %p41
        %p255 = pneg %p38
        %p256 = scmp.lt.s32.totalorder %s20, 3
        %s257 = scalar_select %p256, %s20, 3
        %s258 = smul.addr %s257, 2
        %s259 = smul.addr %s258, 8
        %s260 = scalar_lea.vmem %s1, %s259
        %p261 = pneg %p67
        %p262 = pneg %p64
        %p263 = scmp.lt.s32.totalorder %s20, 3
        %s264 = scalar_select %p263, %s20, 3
        %s265 = smul.addr %s264, 2
        %s266 = smul.addr %s265, 8
        %s267 = scalar_lea.vmem %s2, %s266
        %p268 = pneg %p93
        %p269 = pneg %p90
        %p270 = scmp.lt.s32.totalorder %s20, 3
        %s271 = scalar_select %p270, %s20, 3
        %s272 = scalar_lea.vmem %s3, %s271
        %p273 = pneg %p119
        %p274 = pneg %p116
        %p275 = pneg %p140
        %p276 = pneg %p137
        %p277 = pneg %p161
        %p278 = pneg %p158
        %p279 = pneg %p187
        %p280 = pneg %p184
        %s281 = sand.u32 %s174, 1
        %s282 = scalar_lea.sflag [#allocation3], %s281
        %s283 = sand.u32 %s174, 1
        %s284 = smul.addr %s283, 16
        %s285 = scalar_lea.vmem [#allocation2], %s284
        %p286 = scmp.lt.s32.totalorder %s20, 3
        %s287 = scalar_select %p286, %s20, 3
        %s288 = smul.addr %s287, 4
        %s289 = smul.addr %s288, 8
        %s290 = scalar_lea.vmem %s0, %s289
        %p291 = scmp.lt.s32.totalorder %s20, 3
        %s292 = scalar_select %p291, %s20, 3
        %s293 = smul.addr %s292, 2
        %s294 = smul.addr %s293, 8
        %s295 = scalar_lea.vmem %s1, %s294
        %p296 = scmp.lt.s32.totalorder %s20, 3
        %s297 = scalar_select %p296, %s20, 3
        %s298 = smul.addr %s297, 2
        %s299 = smul.addr %s298, 8
        %s300 = scalar_lea.vmem %s2, %s299
        %p301 = scmp.lt.s32.totalorder %s20, 3
        %s302 = scalar_select %p301, %s20, 3
        %s303 = scalar_lea.vmem %s3, %s302
        %v304 = vld [vmem:[%s295] sm:$0xff]
        %v305 = vld [vmem:[%s295 + $0x8] sm:$0xff]
        %v306 = vmul.f32 %v304, 0.25
        %v307 = vmul.f32 %v305, 0.25
        %v308 = vld [vmem:[%s290] sm:$0xff]
        %v309 = vld [vmem:[%s290 + $0x8] sm:$0xff]
        %v310 = vld [vmem:[%s290 + $0x10] sm:$0xff]
        %v311 = vld [vmem:[%s290 + $0x18] sm:$0xff]
        %v312 = vld [vmem:[%s303] sm:$0x1]
        %v314 = vperm.slane %v312, 0
        %vm316 = vcmask 130048
        %v318 = vsel %vm316, %v306, 0
        %v321 = vsel %vm316, %v307, 0
        %v324 = vsel %vm316, %v308, 0
        %v327 = vsel %vm316, %v309, 0
        %v330 = vsel %vm316, %v310, 0
        %v333 = vsel %vm316, %v311, 0
        %335 = vmatpush.xpose.msra.mxu0 0.0
        %336 = vmatpush.xpose.msra.mxu0 0.0
        %337 = vmatpush.xpose.msra.mxu0 0.0
        %338 = vmatpush.xpose.msra.mxu0 0.0
        %339 = vmatpush.xpose.msra.mxu0 0.0
        %340 = vmatpush.xpose.msra.mxu0 0.0
        %341 = vmatpush.xpose.msra.mxu0 0.0
        %342 = vmatpush.xpose.msra.mxu0 0.0
        %343 = vmatpush.xpose.msra.mxu0 0.0
        %344 = vmatpush.xpose.msra.mxu0 0.0
        %345 = vmatpush.xpose.msra.mxu0 0.0
        %346 = vmatpush.xpose.msra.mxu0 0.0
        %347 = vmatpush.xpose.msra.mxu0 %v333
        %348 = vmatpush.xpose.msra.mxu0 %v330
        %349 = vmatpush.xpose.msra.mxu0 %v327
        %350 = vmatpush.xpose.msra.mxu0 %v324
        %351 = vmatmul.f32.gmra.mxu0 %v318
        %v352 = vpop.f32.mrf.mxu0
        %v353 = vadd.f32 %v314, %v352
        %354 = vmatmul.f32.gmra.mxu0 %v321
        %v355 = vpop.f32.mrf.mxu0
        %v356 = vadd.f32 %v314, %v355
        %357 = vdwg.mxu0
        %vm358 = vcmask 261120
        %v359 = vsel %vm358, %v353, -inf
        %360 = vmax.xlane.f32.xlu0 %v359
        %v361 = vpop.xlane.xlu0 %360
        %v362 = vsel %vm358, %v356, -inf
        %363 = vmax.xlane.f32.xlu0 %v362
        %v364 = vpop.xlane.xlu0 %363
        %v365 = vsub.f32 %v353, %v361
        %v366 = vsub.f32 %v356, %v364
        %v367 = vmul.f32 %v365, 1.442695
        %v368 = vpow.pop %v367
        %v369 = vmul.f32 %v366, 1.442695
        %v370 = vpow.pop %v369
        %v371 = vsel %vm358, %v368, 0.0
        %372 = vadd.xlane.f32.xlu0 %v371
        %v373 = vpop.xlane.xlu0 %372
        %v374 = vsel %vm358, %v370, 0.0
        %375 = vadd.xlane.f32.xlu0 %v374
        %v376 = vpop.xlane.xlu0 %375
        %v377 = vrcp.pop %v373
        %v378 = vrcp.pop %v376
        %v379 = vld [vmem:[%s4] sm:$0xff]
        %v380 = vld [vmem:[%s4 + $0x8] sm:$0xff]
        %v381 = vld [vmem:[%s4 + $0x10] sm:$0xff]
        %v382 = vld [vmem:[%s4 + $0x18] sm:$0xff]
        %v384 = vsel %vm358, %v368, 0
        %v387 = vsel %vm358, %v370, 0
        %389 = vmatpush.msra.mxu0 0.0
        %390 = vmatpush.msra.mxu0 0.0
        %391 = vmatpush.msra.mxu0 0.0
        %392 = vmatpush.msra.mxu0 0.0
        %393 = vmatpush.msra.mxu0 0.0
        %394 = vmatpush.msra.mxu0 0.0
        %395 = vmatpush.msra.mxu0 0.0
        %396 = vmatpush.msra.mxu0 0.0
        %397 = vmatpush.msra.mxu0 0.0
        %398 = vmatpush.msra.mxu0 0.0
        %399 = vmatpush.msra.mxu0 0.0
        %400 = vmatpush.msra.mxu0 0.0
        %401 = vmatpush.msra.mxu0 %v382
        %402 = vmatpush.msra.mxu0 %v381
        %403 = vmatpush.msra.mxu0 %v380
        %404 = vmatpush.msra.mxu0 %v379
        %405 = vmatmul.f32.gmra.mxu0 %v384
        %v406 = vpop.f32.mrf.mxu0
        %v407 = vadd.f32 0.0, %v406
        %408 = vmatmul.f32.gmra.mxu0 %v387
        %v409 = vpop.f32.mrf.mxu0
        %v410 = vadd.f32 0.0, %v409
        %411 = vdwg.mxu0
        %v412 = vmul.f32 %v407, %v377
        %v413 = vmul.f32 %v410, %v378
        %v414 = vld [vmem:[%s5] sm:$0x1]
        %v416 = vperm.slane %v414, 0
        %v418 = vadd.f32 %v412, %v416
        %v419 = vadd.f32 %v413, %v416
        %v420 = vld [vmem:[%s300] sm:$0xff]
        %v421 = vld [vmem:[%s300 + $0x8] sm:$0xff]
        %v423 = vsel %vm316, %v420, 0
        %v426 = vsel %vm316, %v421, 0
        %v429 = vsel %vm316, %v418, 0
        %v432 = vsel %vm316, %v419, 0
        %434 = vmatpush.xpose.msra.mxu0 0.0
        %435 = vmatpush.xpose.msra.mxu0 0.0
        %436 = vmatpush.xpose.msra.mxu0 0.0
        %437 = vmatpush.xpose.msra.mxu0 0.0
        %438 = vmatpush.xpose.msra.mxu0 0.0
        %439 = vmatpush.xpose.msra.mxu0 0.0
        %440 = vmatpush.xpose.msra.mxu0 0.0
        %441 = vmatpush.xpose.msra.mxu0 0.0
        %442 = vmatpush.xpose.msra.mxu0 0.0
        %443 = vmatpush.xpose.msra.mxu0 0.0
        %444 = vmatpush.xpose.msra.mxu0 0.0
        %445 = vmatpush.xpose.msra.mxu0 0.0
        %446 = vmatpush.xpose.msra.mxu0 0.0
        %447 = vmatpush.xpose.msra.mxu0 0.0
        %448 = vmatpush.xpose.msra.mxu0 %v432
        %449 = vmatpush.xpose.msra.mxu0 %v429
        %450 = vmatmul.f32.gmra.mxu0 %v423
        %v451 = vpop.f32.mrf.mxu0
        %v452 = vadd.f32 0.0, %v451
        %453 = vmatmul.f32.gmra.mxu0 %v426
        %v454 = vpop.f32.mrf.mxu0
        %v455 = vadd.f32 0.0, %v454
        %456 = vdwg.mxu0
        %457 = vst.msk [vmem:[%s285] sm:$0xff] %vm316, %v452
        %458 = vst.msk [vmem:[%s285 + $0x8] sm:$0xff] %vm316, %v455
        %s459 = sand.u32 %s174, 1
        %s460 = scalar_lea.sflag [#allocation3], %s459
        %s461 = sand.u32 %s174, 1
        %s462 = smul.addr %s461, 16
        %s463 = scalar_lea.vmem [#allocation2], %s462
        // Predicated region
        $region45: #{tpu_custom_call.1} parent=43 // pred_check
          %p464 = pneg %p184
        $region46: #{tpu_custom_call.1} parent=43 // pred_check_branch
          %466 = sbr.rel (%p464) target = $region48
        $region47: #{tpu_custom_call.1} parent=43 // pred_region
          %468 = vsyncadd %s460, 0
          %s469 = smul.addr %s20, 2
          %s470 = smul.addr %s469, 8
          %s471 = scalar_lea.hbm %s6, %s470
          %s472 = sshll.u32 %s463, 4
          %s473 = int_to_ptr.vmem [resolvable:$true] %s472
          %s474 = sshll.u32 %s471, 4
          %s475 = int_to_ptr.hbm [resolvable:$true] %s474
          %480 = dma.vmem_to_hbm [thread:$0]  %s473, 256, %s475, %s460, 128, 128, 8
        $region48: #{tpu_custom_call.1} parent=43 // pred_fallthru
          _
      $region44: #{tpu_custom_call.1} parent=5 // pred_fallthru
        _
      %p481 = scmp.le.s32.totalorder 2, %s15
      // Predicated region
      $region49: #{tpu_custom_call.1} parent=5 // pred_check
        %p482 = pneg %p481
      $region50: #{tpu_custom_call.1} parent=5 // pred_check_branch
        %484 = sbr.rel (%p482) target = $region52
      $region51: #{tpu_custom_call.1} parent=5 // pred_region
        %s485 = ssub.s32 %s15, 2
        // Predicated region
        $region53: #{tpu_custom_call.1} parent=51 // pred_check
          %p486 = pneg %p190
        $region54: #{tpu_custom_call.1} parent=51 // pred_check_branch
          %488 = sbr.rel (%p486) target = $region56
        $region55: #{tpu_custom_call.1} parent=51 // pred_region
          %s489 = sand.u32 %s175, 1
          %s490 = scalar_lea.sflag [#allocation3], %s489
          %s491 = sand.u32 %s175, 1
          %s492 = smul.addr %s491, 16
          %s493 = scalar_lea.vmem [#allocation2], %s492
          %495 = dma.done %s490, 256
        $region56: #{tpu_custom_call.1} parent=51 // pred_fallthru
          _
      $region52: #{tpu_custom_call.1} parent=5 // pred_fallthru
        _
    $region6: #{tpu_custom_call.1} parent=1 // loop_footer
      %s19 = sadd.s32 1, %s15
    $region7: #{tpu_custom_call.1} parent=1 // loop_footer_branch
      %14 = sbr.rel target = $region3
    $region8: #{tpu_custom_call.1} parent=1 // loop_exit
      _
    %496 = vsyncpa [#allocation3], 1
    %s497 = scalar_lea.sflag [#allocation3], 1
    %498 = vsyncpa %s497, 1

</llo_original>
